<compile_context>
chip_gen: v6e
topology: v6e:2x2x1
jax: 0.10.0
libtpu: 0.0.40
codegen_flags: <defaults>
</compile_context>

<pallas_src>
import functools
from math import sqrt

import jax
import jax.numpy as jnp
from jax.experimental import pallas as pl
from jax.experimental.pallas import tpu as pltpu


def _round_up(v, m):
    return ((v + m - 1) // m) * m


def _roast_kernel(x_ref, w_ref, idx_ref, g_ref, b_ref, o_ref, wblk_ref,
                  *, compute_dtype):
    """Grid step (n, i): (block_m, idim) slab of x -> (block_m, block_n) of y.

    On the first m step of each odim-tile, decompress the (idim, block_n) block
    of W = weight[IDX] * G into VMEM scratch `wblk_ref`; every m step then runs
    a pure MXU matmul against that cached block.
    """

    @pl.when(pl.program_id(1) == 0)      # first m step for this odim-tile
    def _decompress():
        idim, bn = idx_ref.shape
        wsize = w_ref.shape[1]
        w_row = w_ref[...]                                          # (1, wsize)
        # iota hoisted out of the row loop (JAX does not CSE broadcast/iota).
        kk = jax.lax.broadcasted_iota(jnp.int32, (wsize, bn), 0)    # (wsize, bn)

        def body(i, carry):
            # One row of IDX -> one-hot over the compressed weight axis, then a
            # (1, wsize) @ (wsize, bn) MXU dot performs the gather exactly.
            row_idx = idx_ref[pl.ds(i, 1), :]                       # (1, bn) i32
            onehot = (kk == row_idx).astype(jnp.float32)            # (wsize, bn)
            row_w = jnp.dot(w_row, onehot,
                            preferred_element_type=jnp.float32)     # (1, bn)
            row_w = row_w * g_ref[pl.ds(i, 1), :]                   # apply signs
            wblk_ref[pl.ds(i, 1), :] = row_w.astype(wblk_ref.dtype)
            return carry

        jax.lax.fori_loop(0, idim, body, 0)

    # Hot path (every m step): MXU matmul + bias, f32 accumulation.
    o_ref[...] = (
        jnp.dot(x_ref[...].astype(compute_dtype), wblk_ref[...],
                preferred_element_type=jnp.float32)
        + b_ref[...]
    ).astype(o_ref.dtype)


def roast_linear(x, weight, idx, g, bias, *, block_m=128, block_n=256,
                 compute_dtype=jnp.float32, vmem_limit_bytes=None):
    """y = x @ (weight[idx] * g) + bias, tiled over (m, odim).

    compute_dtype=jnp.bfloat16 feeds the bf16 MXU on v6e/v7x (f32 accumulation).
    vmem_limit_bytes: raise on v5e (16 MiB default scoped VMEM) / tune on v7x
    (64 MiB physical) when using large tiles.
    """
    m, idim = x.shape
    idim_i, odim = idx.shape
    assert idim_i == idim, (idim_i, idim)
    wsize = weight.shape[0]

    # --- m tile: multiple of 8 (f32 sublane), ragged m handled by zero-pad ----
    bm = min(block_m, _round_up(m, 8))
    bm = max(8, _round_up(bm, 8))
    m_pad = _round_up(m, bm)
    if m_pad != m:
        x = jnp.pad(x, ((0, m_pad - m), (0, 0)))

    # --- n tile: lane-dense multiple of 128 when odim allows, else full odim --
    if odim % 128 == 0 and odim > block_n:
        bn = block_n if (block_n % 128 == 0 and odim % block_n == 0) else 128
    else:
        bn = odim

    grid = (odim // bn, m_pad // bm)     # n outer (parallel), m inner (arbitrary)

    w2 = weight.reshape(1, wsize).astype(jnp.float32)
    b2 = bias.reshape(1, odim).astype(jnp.float32)
    idx32 = idx.astype(jnp.int32)
    g32 = g.astype(jnp.float32)

    out = pl.pallas_call(
        functools.partial(_roast_kernel, compute_dtype=compute_dtype),
        out_shape=jax.ShapeDtypeStruct((m_pad, odim), jnp.float32),
        grid_spec=pltpu.PrefetchScalarGridSpec(
            num_scalar_prefetch=0,
            grid=grid,
            in_specs=[
                pl.BlockSpec((bm, idim), lambda n, i: (i, 0)),      # x tile
                pl.BlockSpec((1, wsize), lambda n, i: (0, 0)),      # compressed w
                pl.BlockSpec((idim, bn), lambda n, i: (0, n)),      # IDX block
                pl.BlockSpec((idim, bn), lambda n, i: (0, n)),      # G block
                pl.BlockSpec((1, bn), lambda n, i: (0, n)),         # bias block
            ],
            out_specs=pl.BlockSpec((bm, bn), lambda n, i: (i, n)),
            scratch_shapes=[
                # decompressed W block, persistent across the m loop
                pltpu.VMEM((idim, bn), compute_dtype),
            ],
        ),
        compiler_params=pltpu.CompilerParams(
            dimension_semantics=("parallel", "arbitrary"),
            vmem_limit_bytes=vmem_limit_bytes,
        ),
    )(x, w2, idx32, g32, b2)

    return out[:m]


if __name__ == "__main__":
    # small shapes consistent with RoastLinear(input=32, output=32, compression=0.5)
    idim, odim, compression = 32, 32, 0.5
    wsize = int(idim * odim * compression)   # 512
    batch = 16

    key = jax.random.PRNGKey(0)
    k_w, k_idx, k_g, k_x = jax.random.split(key, 4)

    # deterministic parameter init mirroring __init__:
    #   weight ~ U(-1/sqrt(idim), 1/sqrt(idim)), IDX ~ randint(0, wsize),
    #   G in {-1, +1}, bias = zeros(odim)
    weight = jax.random.uniform(
        k_w, (wsize,), jnp.float32, -1.0 / sqrt(idim), 1.0 / sqrt(idim)
    )
    idx = jax.random.randint(k_idx, (idim, odim), 0, wsize, dtype=jnp.int32)
    g = jax.random.randint(k_g, (idim, odim), 0, 2).astype(jnp.float32) * 2.0 - 1.0
    bias = jnp.zeros((odim,), jnp.float32)

    x = jax.random.normal(k_x, (batch, idim), jnp.float32)

    # pure-JAX reference
    w_full = weight[idx] * g
    y_ref = x @ w_full + bias

    # default (f32) path -- exact module numerics
    y = jax.block_until_ready(roast_linear(x, weight, idx, g, bias))
    assert y.shape == (batch, odim)
    assert jnp.allclose(y, y_ref, atol=1e-4, rtol=1e-4), (
        f"f32 mismatch: max abs err {float(jnp.max(jnp.abs(y - y_ref)))}"
    )

    # bf16 compute path (v6e/v7x MXU fast path), f32 accumulation
    y_bf16 = jax.block_until_ready(
        roast_linear(x, weight, idx, g, bias, compute_dtype=jnp.bfloat16)
    )
    assert jnp.allclose(y_bf16, y_ref, atol=5e-2, rtol=5e-2), (
        f"bf16 mismatch: max abs err {float(jnp.max(jnp.abs(y_bf16 - y_ref)))}"
    )

    # ragged batch (exercises the padding path instead of the old assert)
    y_r = jax.block_until_ready(roast_linear(x[:11], weight, idx, g, bias))
    assert jnp.allclose(y_r, y_ref[:11], atol=1e-4, rtol=1e-4), (
        f"ragged mismatch: max abs err {float(jnp.max(jnp.abs(y_r - y_ref[:11])))}"
    )

    print("KERNEL_OK")
</pallas_src>

<mosaic_0001>
module attributes {stable_mosaic.version = 11 : i64} {
  func.func @_roast_kernel(%arg0: i32, %arg1: i32, %arg2: memref<16x32xf32, #tpu.memory_space<vmem>>, %arg3: memref<1x512xf32, #tpu.memory_space<vmem>>, %arg4: memref<32x32xi32, #tpu.memory_space<vmem>>, %arg5: memref<32x32xf32, #tpu.memory_space<vmem>>, %arg6: memref<1x32xf32, #tpu.memory_space<vmem>>, %arg7: memref<16x32xf32, #tpu.memory_space<vmem>>, %arg8: memref<32x32xf32, #tpu.memory_space<vmem>>) attributes {dimension_semantics = [#tpu.dimension_semantics<parallel>, #tpu.dimension_semantics<arbitrary>], iteration_bounds = array<i64: 1, 1>, scalar_prefetch = 0 : i64, scratch_operands = 1 : i64, tpu.core_type = #tpu.core_type<tc>, window_params = [{transform_indices = @transform_0, window_bounds = array<i64: 16, 32>}, {pipeline_mode = #tpu.pipeline_mode<synchronous>, transform_indices = @transform_1, window_bounds = array<i64: 1, 512>}, {transform_indices = @transform_2, window_bounds = array<i64: 32, 32>}, {transform_indices = @transform_3, window_bounds = array<i64: 32, 32>}, {transform_indices = @transform_4, window_bounds = array<i64: 1, 32>}, {transform_indices = @transform_5, window_bounds = array<i64: 16, 32>}]} {
    %c0_i32 = arith.constant 0 : i32
    %0 = arith.cmpi eq, %arg1, %c0_i32 : i32
    %1 = arith.extui %0 : i1 to i32
    %c0_i32_0 = arith.constant 0 : i32
    %2 = arith.cmpi ne, %1, %c0_i32_0 : i32
    scf.if %2 {
      %c0_8 = arith.constant 0 : index
      %c0_9 = arith.constant 0 : index
      %10 = vector.load %arg3[%c0_8, %c0_9] : memref<1x512xf32, #tpu.memory_space<vmem>>, vector<1x512xf32>
      %11 = tpu.iota {dimensions = array<i32: 0>} : vector<512x32xi32>
      %c0_i32_10 = arith.constant 0 : i32
      %c32_i32 = arith.constant 32 : i32
      %12 = arith.addi %c0_i32_10, %c32_i32 : i32
      %c1_i32 = arith.constant 1 : i32
      scf.for %arg9 = %c0_i32_10 to %12 step %c1_i32  : i32 {
        %13 = arith.index_cast %arg9 : i32 to index
        %c0_12 = arith.constant 0 : index
        %14 = vector.load %arg4[%13, %c0_12] : memref<32x32xi32, #tpu.memory_space<vmem>>, vector<1x32xi32>
        %15 = vector.broadcast %14 : vector<1x32xi32> to vector<512x32xi32>
        %16 = arith.cmpi eq, %11, %15 : vector<512x32xi32>
        %17 = arith.extui %16 : vector<512x32xi1> to vector<512x32xi32>
        %18 = arith.sitofp %17 : vector<512x32xi32> to vector<512x32xf32>
        %cst_13 = arith.constant dense<0.000000e+00> : vector<1x32xf32>
        %19 = tpu.matmul %10, %18, %cst_13 {dimension_numbers = #tpu.dot_dimension_numbers<[1], [0], [0], [1], [0, 0, 1, 1], [], []>} : vector<1x512xf32>, vector<512x32xf32>, vector<1x32xf32> -> vector<1x32xf32>
        %20 = arith.index_cast %arg9 : i32 to index
        %c0_14 = arith.constant 0 : index
        %21 = vector.load %arg5[%20, %c0_14] : memref<32x32xf32, #tpu.memory_space<vmem>>, vector<1x32xf32>
        %22 = arith.mulf %19, %21 : vector<1x32xf32>
        %23 = arith.index_cast %arg9 : i32 to index
        %c0_15 = arith.constant 0 : index
        %24 = vector.load %arg8[%23, %c0_15] : memref<32x32xf32, #tpu.memory_space<vmem>>, vector<1x32xf32>
        tpu.vector_store %arg8[%23, %c0_15], %22 {strides = array<i32>} : memref<32x32xf32, #tpu.memory_space<vmem>>, vector<1x32xf32>,
      }
      %c32_i32_11 = arith.constant 32 : i32
    } else {
    }
    %c0 = arith.constant 0 : index
    %c0_1 = arith.constant 0 : index
    %3 = vector.load %arg2[%c0, %c0_1] : memref<16x32xf32, #tpu.memory_space<vmem>>, vector<16x32xf32>
    %c0_2 = arith.constant 0 : index
    %c0_3 = arith.constant 0 : index
    %4 = vector.load %arg8[%c0_2, %c0_3] : memref<32x32xf32, #tpu.memory_space<vmem>>, vector<32x32xf32>
    %cst = arith.constant dense<0.000000e+00> : vector<16x32xf32>
    %5 = tpu.matmul %3, %4, %cst {dimension_numbers = #tpu.dot_dimension_numbers<[1], [0], [0], [1], [0, 0, 1, 1], [], []>} : vector<16x32xf32>, vector<32x32xf32>, vector<16x32xf32> -> vector<16x32xf32>
    %c0_4 = arith.constant 0 : index
    %c0_5 = arith.constant 0 : index
    %6 = vector.load %arg6[%c0_4, %c0_5] : memref<1x32xf32, #tpu.memory_space<vmem>>, vector<1x32xf32>
    %7 = vector.broadcast %6 : vector<1x32xf32> to vector<16x32xf32>
    %8 = arith.addf %5, %7 : vector<16x32xf32>
    %c0_6 = arith.constant 0 : index
    %c0_7 = arith.constant 0 : index
    %9 = vector.load %arg7[%c0_6, %c0_7] : memref<16x32xf32, #tpu.memory_space<vmem>>, vector<16x32xf32>
    tpu.vector_store %arg7[%c0_6, %c0_7], %8 {strides = array<i32>} : memref<16x32xf32, #tpu.memory_space<vmem>>, vector<16x32xf32>,
    return
  }
  func.func @transform_0(%arg0: i32, %arg1: i32) -> (i32, i32) {
    %c0_i32 = arith.constant 0 : i32
    %c0_i32_0 = arith.constant 0 : i32
    return %arg1, %c0_i32 : i32, i32
  }
  func.func @transform_1(%arg0: i32, %arg1: i32) -> (i32, i32) {
    %c0_i32 = arith.constant 0 : i32
    %c0_i32_0 = arith.constant 0 : i32
    %c0_i32_1 = arith.constant 0 : i32
    return %c0_i32, %c0_i32_0 : i32, i32
  }
  func.func @transform_2(%arg0: i32, %arg1: i32) -> (i32, i32) {
    %c0_i32 = arith.constant 0 : i32
    %c0_i32_0 = arith.constant 0 : i32
    return %c0_i32, %arg0 : i32, i32
  }
  func.func @transform_3(%arg0: i32, %arg1: i32) -> (i32, i32) {
    %c0_i32 = arith.constant 0 : i32
    %c0_i32_0 = arith.constant 0 : i32
    return %c0_i32, %arg0 : i32, i32
  }
  func.func @transform_4(%arg0: i32, %arg1: i32) -> (i32, i32) {
    %c0_i32 = arith.constant 0 : i32
    %c0_i32_0 = arith.constant 0 : i32
    return %c0_i32, %arg0 : i32, i32
  }
  func.func @transform_5(%arg0: i32, %arg1: i32) -> (i32, i32) {
    %c0_i32 = arith.constant 0 : i32
    return %arg1, %arg0 : i32, i32
  }
}

</mosaic_0001>

<llo_original>
// kernel: tpu_custom_call.1
$region0: #{tpu_custom_call.1}
  #allocation0 [shape = 'u32[]', space=smem, size = 0x4, offset = 0x4, fixed_abs, tag = 'smem constant byte address 0x4 - core index']
  #allocation1 [shape = 'u32[144,128]{1,0:T(1,128)}', space=vmem, size = 0x12000, scoped, tag = 'internal scratch']
  #allocation2 [shape = 'f32[32,32]{1,0:T(8,128)}', space=vmem, size = 0x4000, scoped, tag = 'scratch operand']
  %s0 = inlined_call_operand.hbm [shape: f32[16,32], index: 0, kind: input, shape index: {}]
  %s1 = inlined_call_operand.hbm [shape: f32[1,512], index: 1, kind: input, shape index: {}]
  %s2 = inlined_call_operand.hbm [shape: s32[32,32], index: 2, kind: input, shape index: {}]
  %s3 = inlined_call_operand.hbm [shape: f32[32,32], index: 3, kind: input, shape index: {}]
  %s4 = inlined_call_operand.vmem [shape: f32[1,32], index: 4, kind: input, shape index: {}]
  %s5 = inlined_call_operand.hbm [shape: f32[16,32], index: 5, kind: output, shape index: {}]
  %s6 = sld [smem:[#allocation0]]
  $region57: #{tpu_custom_call.1} parent=0
    _
  %s8 = ssub.s32 1, %s6
  %s9 = scalar_select 0, %s8, %s6
  $region1: #{tpu_custom_call.1} parent=0
    #allocation3 [shape = 'u8[8192]{0}', space=vmem, size = 0x2000, scoped, tag = 'input window, operand 0, single buffered']
    #allocation4 [shape = 's32[1]{0}', space=sflag, size = 0x4, scoped, tag = 'scoped memory for tpu_custom_call.1']
    #allocation5 [shape = 's32[1]{0}', space=sflag, size = 0x4, scoped, tag = 'scoped memory for tpu_custom_call.1']
    #allocation6 [shape = 'u8[2048]{0}', space=vmem, size = 0x800, scoped, tag = 'input window, operand 1, single buffered']
    #allocation7 [shape = 's32[1]{0}', space=sflag, size = 0x4, scoped, tag = 'scoped memory for tpu_custom_call.1']
    #allocation8 [shape = 'u8[16384]{0}', space=vmem, size = 0x4000, scoped, tag = 'input window, operand 2, single buffered']
    #allocation9 [shape = 'u8[16384]{0}', space=vmem, size = 0x4000, scoped, tag = 'input window, operand 3, single buffered']
    #allocation10 [shape = 's32[1]{0}', space=sflag, size = 0x4, scoped, tag = 'scoped memory for tpu_custom_call.1']
    #allocation11 [shape = 'u8[8192]{0}', space=vmem, size = 0x2000, scoped, tag = 'output window, operand 0, single buffered']
    %10 = vsyncpa [#allocation4], 0
    %11 = vsyncpa [#allocation7], 0
    %12 = vsyncpa [#allocation10], 0
    %13 = vsyncpa [#allocation5], 0
    // Predicated region
    $region2: #{tpu_custom_call.1} parent=1 // pred_check
      _
    $region3: #{tpu_custom_call.1} parent=1 // pred_check_branch
      %15 = sbr.rel (0) target = $region5
    $region4: #{tpu_custom_call.1} parent=1 // pred_region
      %s17 = ssub.s32 256, 256
      %18 = vsyncadd [#allocation4], %s17
      %s19 = sshll.u32 [#allocation3], 4
      %s20 = int_to_ptr.vmem [resolvable:$true] %s19
      %25 = dma.hbm_to_vmem [thread:$0]  %s0, 256, %s20, [#allocation4], 128, 128, 8
    $region5: #{tpu_custom_call.1} parent=1 // pred_fallthru
      _
    // Predicated region
    $region6: #{tpu_custom_call.1} parent=1 // pred_check
      _
    $region7: #{tpu_custom_call.1} parent=1 // pred_check_branch
      %27 = sbr.rel (0) target = $region9
    $region8: #{tpu_custom_call.1} parent=1 // pred_region
      %s29 = ssub.s32 64, 64
      %30 = vsyncadd [#allocation7], %s29
      %s32 = sshll.u32 [#allocation6], 4
      %s33 = int_to_ptr.vmem [resolvable:$true] %s32
      %35 = dma.hbm_to_vmem [thread:$0]  %s1, 64, %s33, [#allocation7]
    $region9: #{tpu_custom_call.1} parent=1 // pred_fallthru
      _
    // Predicated region
    $region10: #{tpu_custom_call.1} parent=1 // pred_check
      _
    $region11: #{tpu_custom_call.1} parent=1 // pred_check_branch
      %37 = sbr.rel (0) target = $region13
    $region12: #{tpu_custom_call.1} parent=1 // pred_region
      %s39 = ssub.s32 512, 512
      %40 = vsyncadd [#allocation7], %s39
      %s41 = sshll.u32 [#allocation8], 4
      %s42 = int_to_ptr.vmem [resolvable:$true] %s41
      %47 = dma.hbm_to_vmem [thread:$0]  %s2, 512, %s42, [#allocation7], 128, 128, 8
    $region13: #{tpu_custom_call.1} parent=1 // pred_fallthru
      _
    // Predicated region
    $region14: #{tpu_custom_call.1} parent=1 // pred_check
      _
    $region15: #{tpu_custom_call.1} parent=1 // pred_check_branch
      %49 = sbr.rel (0) target = $region17
    $region16: #{tpu_custom_call.1} parent=1 // pred_region
      %s51 = ssub.s32 512, 512
      %52 = vsyncadd [#allocation10], %s51
      %s53 = sshll.u32 [#allocation9], 4
      %s54 = int_to_ptr.vmem [resolvable:$true] %s53
      %59 = dma.hbm_to_vmem [thread:$0]  %s3, 512, %s54, [#allocation10], 128, 128, 8
    $region17: #{tpu_custom_call.1} parent=1 // pred_fallthru
      _
    // Predicated region
    $region18: #{tpu_custom_call.1} parent=1 // pred_check
      _
    $region19: #{tpu_custom_call.1} parent=1 // pred_check_branch
      %61 = sbr.rel (0) target = $region21
    $region20: #{tpu_custom_call.1} parent=1 // pred_region
      _
    $region21: #{tpu_custom_call.1} parent=1 // pred_fallthru
      _
    // Predicated region
    $region22: #{tpu_custom_call.1} parent=1 // pred_check
      _
    $region23: #{tpu_custom_call.1} parent=1 // pred_check_branch
      %63 = sbr.rel (0) target = $region25
    $region24: #{tpu_custom_call.1} parent=1 // pred_region
      %64 = dma.done [#allocation4], 256
    $region25: #{tpu_custom_call.1} parent=1 // pred_fallthru
      _
    // Predicated region
    $region26: #{tpu_custom_call.1} parent=1 // pred_check
      _
    $region27: #{tpu_custom_call.1} parent=1 // pred_check_branch
      %66 = sbr.rel (0) target = $region29
    $region28: #{tpu_custom_call.1} parent=1 // pred_region
      %67 = dma.done [#allocation7], 64
    $region29: #{tpu_custom_call.1} parent=1 // pred_fallthru
      _
    // Predicated region
    $region30: #{tpu_custom_call.1} parent=1 // pred_check
      _
    $region31: #{tpu_custom_call.1} parent=1 // pred_check_branch
      %69 = sbr.rel (0) target = $region33
    $region32: #{tpu_custom_call.1} parent=1 // pred_region
      %70 = dma.done [#allocation7], 512
    $region33: #{tpu_custom_call.1} parent=1 // pred_fallthru
      _
    // Predicated region
    $region34: #{tpu_custom_call.1} parent=1 // pred_check
      _
    $region35: #{tpu_custom_call.1} parent=1 // pred_check_branch
      %72 = sbr.rel (0) target = $region37
    $region36: #{tpu_custom_call.1} parent=1 // pred_region
      %73 = dma.done [#allocation10], 512
    $region37: #{tpu_custom_call.1} parent=1 // pred_fallthru
      _
    %p74 = scmp.eq.s32.totalorder 0, 0
    // Predicated region
    $region38: #{tpu_custom_call.1} parent=1 // pred_check
      %p75 = pneg %p74
    $region39: #{tpu_custom_call.1} parent=1 // pred_check_branch
      %77 = sbr.rel (%p75) target = $region41
    $region40: #{tpu_custom_call.1} parent=1 // pred_region
      %v78 = vld [vmem:[#allocation6] sm:$0xf]
      %v79 = vlaneseq
      %v80 = vshrl.u32 %v79, 7
      %v81 = vadd.s32 %v80, 8
      %v82 = vadd.s32 %v80, 16
      %v83 = vadd.s32 %v80, 24
      %v84 = vadd.s32 %v80, 32
      %v85 = vadd.s32 %v80, 40
      %v86 = vadd.s32 %v80, 48
      %v87 = vadd.s32 %v80, 56
      %v88 = vadd.s32 %v80, 64
      %v89 = vadd.s32 %v80, 72
      %v90 = vadd.s32 %v80, 80
      %v91 = vadd.s32 %v80, 88
      %v92 = vadd.s32 %v80, 96
      %v93 = vadd.s32 %v80, 104
      %v94 = vadd.s32 %v80, 112
      %v95 = vadd.s32 %v80, 120
      %v96 = vadd.s32 %v80, 128
      %v97 = vadd.s32 %v80, 136
      %v98 = vadd.s32 %v80, 144
      %v99 = vadd.s32 %v80, 152
      %v100 = vadd.s32 %v80, 160
      %v101 = vadd.s32 %v80, 168
      %v102 = vadd.s32 %v80, 176
      %v103 = vadd.s32 %v80, 184
      %v104 = vadd.s32 %v80, 192
      %v105 = vadd.s32 %v80, 200
      %v106 = vadd.s32 %v80, 208
      %v107 = vadd.s32 %v80, 216
      %v108 = vadd.s32 %v80, 224
      %v109 = vadd.s32 %v80, 232
      %v110 = vadd.s32 %v80, 240
      %v111 = vadd.s32 %v80, 248
      %v112 = vadd.s32 %v80, 256
      %v113 = vadd.s32 %v80, 264
      %v114 = vadd.s32 %v80, 272
      %v115 = vadd.s32 %v80, 280
      %v116 = vadd.s32 %v80, 288
      %v117 = vadd.s32 %v80, 296
      %v118 = vadd.s32 %v80, 304
      %v119 = vadd.s32 %v80, 312
      %v120 = vadd.s32 %v80, 320
      %v121 = vadd.s32 %v80, 328
      %v122 = vadd.s32 %v80, 336
      %v123 = vadd.s32 %v80, 344
      %v124 = vadd.s32 %v80, 352
      %v125 = vadd.s32 %v80, 360
      %v126 = vadd.s32 %v80, 368
      %v127 = vadd.s32 %v80, 376
      %v128 = vadd.s32 %v80, 384
      %v129 = vadd.s32 %v80, 392
      %v130 = vadd.s32 %v80, 400
      %v131 = vadd.s32 %v80, 408
      %v132 = vadd.s32 %v80, 416
      %v133 = vadd.s32 %v80, 424
      %v134 = vadd.s32 %v80, 432
      %v135 = vadd.s32 %v80, 440
      %v136 = vadd.s32 %v80, 448
      %v137 = vadd.s32 %v80, 456
      %v138 = vadd.s32 %v80, 464
      %v139 = vadd.s32 %v80, 472
      %v140 = vadd.s32 %v80, 480
      %v141 = vadd.s32 %v80, 488
      %v142 = vadd.s32 %v80, 496
      %v143 = vadd.s32 %v80, 504
      loop: start=0, step=1, limit=32
      $region42: #{tpu_custom_call.1} parent=40 // loop_pre_header
        _
      $region43: #{tpu_custom_call.1} parent=40 // loop_header
        %s145 = sphi 0, %s149
        %p146 = scmp.ge.s32.totalorder %s145, 32
      $region44: #{tpu_custom_call.1} parent=40 // loop_header_branch
        %148 = sbr.rel (%p146) target = $region48
      $region45: #{tpu_custom_call.1} parent=40 // loop_body
        %s150 = scalar_lea.vmem [#allocation8], %s145
        %v151 = vld [vmem:[%s150] sm:$0x1]
        %v152 = vlaneseq
        %v153 = vshrl.u32 %v152, 7
        %v154 = vsub.s32 0, %v153
        %v155 = vrot.slane %v151, %v154
        %vm156 = vcmp.eq.s32.totalorder %v80, %v155
        %vm157 = vcmp.eq.s32.totalorder %v81, %v155
        %vm158 = vcmp.eq.s32.totalorder %v82, %v155
        %vm159 = vcmp.eq.s32.totalorder %v83, %v155
        %vm160 = vcmp.eq.s32.totalorder %v84, %v155
        %vm161 = vcmp.eq.s32.totalorder %v85, %v155
        %vm162 = vcmp.eq.s32.totalorder %v86, %v155
        %vm163 = vcmp.eq.s32.totalorder %v87, %v155
        %vm164 = vcmp.eq.s32.totalorder %v88, %v155
        %vm165 = vcmp.eq.s32.totalorder %v89, %v155
        %vm166 = vcmp.eq.s32.totalorder %v90, %v155
        %vm167 = vcmp.eq.s32.totalorder %v91, %v155
        %vm168 = vcmp.eq.s32.totalorder %v92, %v155
        %vm169 = vcmp.eq.s32.totalorder %v93, %v155
        %vm170 = vcmp.eq.s32.totalorder %v94, %v155
        %vm171 = vcmp.eq.s32.totalorder %v95, %v155
        %vm172 = vcmp.eq.s32.totalorder %v96, %v155
        %vm173 = vcmp.eq.s32.totalorder %v97, %v155
        %vm174 = vcmp.eq.s32.totalorder %v98, %v155
        %vm175 = vcmp.eq.s32.totalorder %v99, %v155
        %vm176 = vcmp.eq.s32.totalorder %v100, %v155
        %vm177 = vcmp.eq.s32.totalorder %v101, %v155
        %vm178 = vcmp.eq.s32.totalorder %v102, %v155
        %vm179 = vcmp.eq.s32.totalorder %v103, %v155
        %vm180 = vcmp.eq.s32.totalorder %v104, %v155
        %vm181 = vcmp.eq.s32.totalorder %v105, %v155
        %vm182 = vcmp.eq.s32.totalorder %v106, %v155
        %vm183 = vcmp.eq.s32.totalorder %v107, %v155
        %vm184 = vcmp.eq.s32.totalorder %v108, %v155
        %vm185 = vcmp.eq.s32.totalorder %v109, %v155
        %vm186 = vcmp.eq.s32.totalorder %v110, %v155
        %vm187 = vcmp.eq.s32.totalorder %v111, %v155
        %vm188 = vcmp.eq.s32.totalorder %v112, %v155
        %vm189 = vcmp.eq.s32.totalorder %v113, %v155
        %vm190 = vcmp.eq.s32.totalorder %v114, %v155
        %vm191 = vcmp.eq.s32.totalorder %v115, %v155
        %vm192 = vcmp.eq.s32.totalorder %v116, %v155
        %vm193 = vcmp.eq.s32.totalorder %v117, %v155
        %vm194 = vcmp.eq.s32.totalorder %v118, %v155
        %vm195 = vcmp.eq.s32.totalorder %v119, %v155
        %vm196 = vcmp.eq.s32.totalorder %v120, %v155
        %vm197 = vcmp.eq.s32.totalorder %v121, %v155
        %vm198 = vcmp.eq.s32.totalorder %v122, %v155
        %vm199 = vcmp.eq.s32.totalorder %v123, %v155
        %vm200 = vcmp.eq.s32.totalorder %v124, %v155
        %vm201 = vcmp.eq.s32.totalorder %v125, %v155
        %vm202 = vcmp.eq.s32.totalorder %v126, %v155
        %vm203 = vcmp.eq.s32.totalorder %v127, %v155
        %vm204 = vcmp.eq.s32.totalorder %v128, %v155
        %vm205 = vcmp.eq.s32.totalorder %v129, %v155
        %vm206 = vcmp.eq.s32.totalorder %v130, %v155
        %vm207 = vcmp.eq.s32.totalorder %v131, %v155
        %vm208 = vcmp.eq.s32.totalorder %v132, %v155
        %vm209 = vcmp.eq.s32.totalorder %v133, %v155
        %vm210 = vcmp.eq.s32.totalorder %v134, %v155
        %vm211 = vcmp.eq.s32.totalorder %v135, %v155
        %vm212 = vcmp.eq.s32.totalorder %v136, %v155
        %vm213 = vcmp.eq.s32.totalorder %v137, %v155
        %vm214 = vcmp.eq.s32.totalorder %v138, %v155
        %vm215 = vcmp.eq.s32.totalorder %v139, %v155
        %vm216 = vcmp.eq.s32.totalorder %v140, %v155
        %vm217 = vcmp.eq.s32.totalorder %v141, %v155
        %vm218 = vcmp.eq.s32.totalorder %v142, %v155
        %vm219 = vcmp.eq.s32.totalorder %v143, %v155
        %v220 = vsel %vm156, 1, 0
        %v221 = vsel %vm157, 1, 0
        %v222 = vsel %vm158, 1, 0
        %v223 = vsel %vm159, 1, 0
        %v224 = vsel %vm160, 1, 0
        %v225 = vsel %vm161, 1, 0
        %v226 = vsel %vm162, 1, 0
        %v227 = vsel %vm163, 1, 0
        %v228 = vsel %vm164, 1, 0
        %v229 = vsel %vm165, 1, 0
        %v230 = vsel %vm166, 1, 0
        %v231 = vsel %vm167, 1, 0
        %v232 = vsel %vm168, 1, 0
        %v233 = vsel %vm169, 1, 0
        %v234 = vsel %vm170, 1, 0
        %v235 = vsel %vm171, 1, 0
        %v236 = vsel %vm172, 1, 0
        %v237 = vsel %vm173, 1, 0
        %v238 = vsel %vm174, 1, 0
        %v239 = vsel %vm175, 1, 0
        %v240 = vsel %vm176, 1, 0
        %v241 = vsel %vm177, 1, 0
        %v242 = vsel %vm178, 1, 0
        %v243 = vsel %vm179, 1, 0
        %v244 = vsel %vm180, 1, 0
        %v245 = vsel %vm181, 1, 0
        %v246 = vsel %vm182, 1, 0
        %v247 = vsel %vm183, 1, 0
        %v248 = vsel %vm184, 1, 0
        %v249 = vsel %vm185, 1, 0
        %v250 = vsel %vm186, 1, 0
        %v251 = vsel %vm187, 1, 0
        %v252 = vsel %vm188, 1, 0
        %v253 = vsel %vm189, 1, 0
        %v254 = vsel %vm190, 1, 0
        %v255 = vsel %vm191, 1, 0
        %v256 = vsel %vm192, 1, 0
        %v257 = vsel %vm193, 1, 0
        %v258 = vsel %vm194, 1, 0
        %v259 = vsel %vm195, 1, 0
        %v260 = vsel %vm196, 1, 0
        %v261 = vsel %vm197, 1, 0
        %v262 = vsel %vm198, 1, 0
        %v263 = vsel %vm199, 1, 0
        %v264 = vsel %vm200, 1, 0
        %v265 = vsel %vm201, 1, 0
        %v266 = vsel %vm202, 1, 0
        %v267 = vsel %vm203, 1, 0
        %v268 = vsel %vm204, 1, 0
        %v269 = vsel %vm205, 1, 0
        %v270 = vsel %vm206, 1, 0
        %v271 = vsel %vm207, 1, 0
        %v272 = vsel %vm208, 1, 0
        %v273 = vsel %vm209, 1, 0
        %v274 = vsel %vm210, 1, 0
        %v275 = vsel %vm211, 1, 0
        %v276 = vsel %vm212, 1, 0
        %v277 = vsel %vm213, 1, 0
        %v278 = vsel %vm214, 1, 0
        %v279 = vsel %vm215, 1, 0
        %v280 = vsel %vm216, 1, 0
        %v281 = vsel %vm217, 1, 0
        %v282 = vsel %vm218, 1, 0
        %v283 = vsel %vm219, 1, 0
        %v284 = vcvt.s32.f32 %v220
        %v285 = vcvt.s32.f32 %v221
        %v286 = vcvt.s32.f32 %v222
        %v287 = vcvt.s32.f32 %v223
        %v288 = vcvt.s32.f32 %v224
        %v289 = vcvt.s32.f32 %v225
        %v290 = vcvt.s32.f32 %v226
        %v291 = vcvt.s32.f32 %v227
        %v292 = vcvt.s32.f32 %v228
        %v293 = vcvt.s32.f32 %v229
        %v294 = vcvt.s32.f32 %v230
        %v295 = vcvt.s32.f32 %v231
        %v296 = vcvt.s32.f32 %v232
        %v297 = vcvt.s32.f32 %v233
        %v298 = vcvt.s32.f32 %v234
        %v299 = vcvt.s32.f32 %v235
        %v300 = vcvt.s32.f32 %v236
        %v301 = vcvt.s32.f32 %v237
        %v302 = vcvt.s32.f32 %v238
        %v303 = vcvt.s32.f32 %v239
        %v304 = vcvt.s32.f32 %v240
        %v305 = vcvt.s32.f32 %v241
        %v306 = vcvt.s32.f32 %v242
        %v307 = vcvt.s32.f32 %v243
        %v308 = vcvt.s32.f32 %v244
        %v309 = vcvt.s32.f32 %v245
        %v310 = vcvt.s32.f32 %v246
        %v311 = vcvt.s32.f32 %v247
        %v312 = vcvt.s32.f32 %v248
        %v313 = vcvt.s32.f32 %v249
        %v314 = vcvt.s32.f32 %v250
        %v315 = vcvt.s32.f32 %v251
        %v316 = vcvt.s32.f32 %v252
        %v317 = vcvt.s32.f32 %v253
        %v318 = vcvt.s32.f32 %v254
        %v319 = vcvt.s32.f32 %v255
        %v320 = vcvt.s32.f32 %v256
        %v321 = vcvt.s32.f32 %v257
        %v322 = vcvt.s32.f32 %v258
        %v323 = vcvt.s32.f32 %v259
        %v324 = vcvt.s32.f32 %v260
        %v325 = vcvt.s32.f32 %v261
        %v326 = vcvt.s32.f32 %v262
        %v327 = vcvt.s32.f32 %v263
        %v328 = vcvt.s32.f32 %v264
        %v329 = vcvt.s32.f32 %v265
        %v330 = vcvt.s32.f32 %v266
        %v331 = vcvt.s32.f32 %v267
        %v332 = vcvt.s32.f32 %v268
        %v333 = vcvt.s32.f32 %v269
        %v334 = vcvt.s32.f32 %v270
        %v335 = vcvt.s32.f32 %v271
        %v336 = vcvt.s32.f32 %v272
        %v337 = vcvt.s32.f32 %v273
        %v338 = vcvt.s32.f32 %v274
        %v339 = vcvt.s32.f32 %v275
        %v340 = vcvt.s32.f32 %v276
        %v341 = vcvt.s32.f32 %v277
        %v342 = vcvt.s32.f32 %v278
        %v343 = vcvt.s32.f32 %v279
        %v344 = vcvt.s32.f32 %v280
        %v345 = vcvt.s32.f32 %v281
        %v346 = vcvt.s32.f32 %v282
        %v347 = vcvt.s32.f32 %v283
        %v349 = vlaneseq
        %v350 = vshrl.u32 %v349, 7
        %v351 = vsub.s32 0, %v350
        %v352 = vrot.slane %v78, %v351
        %v353 = vlaneseq
        %v354 = vshrl.u32 %v353, 7
        %v355 = vsub.s32 1, %v354
        %v356 = vrot.slane %v78, %v355
        %v357 = vlaneseq
        %v358 = vshrl.u32 %v357, 7
        %v359 = vsub.s32 2, %v358
        %v360 = vrot.slane %v78, %v359
        %v361 = vlaneseq
        %v362 = vshrl.u32 %v361, 7
        %v363 = vsub.s32 3, %v362
        %v364 = vrot.slane %v78, %v363
        %369 = vmatprep.subr.mxu0 0.0
        %370 = vmatpush1.msra.mxu0 %v299
        %371 = vmatprep.subr.mxu0 0.0
        %372 = vmatpush1.msra.mxu0 %v298
        %373 = vmatprep.subr.mxu0 0.0
        %374 = vmatpush1.msra.mxu0 %v297
        %375 = vmatprep.subr.mxu0 0.0
        %376 = vmatpush1.msra.mxu0 %v296
        %377 = vmatprep.subr.mxu0 0.0
        %378 = vmatpush1.msra.mxu0 %v295
        %379 = vmatprep.subr.mxu0 0.0
        %380 = vmatpush1.msra.mxu0 %v294
        %381 = vmatprep.subr.mxu0 0.0
        %382 = vmatpush1.msra.mxu0 %v293
        %383 = vmatprep.subr.mxu0 0.0
        %384 = vmatpush1.msra.mxu0 %v292
        %385 = vmatprep.subr.mxu0 0.0
        %386 = vmatpush1.msra.mxu0 %v291
        %387 = vmatprep.subr.mxu0 0.0
        %388 = vmatpush1.msra.mxu0 %v290
        %389 = vmatprep.subr.mxu0 0.0
        %390 = vmatpush1.msra.mxu0 %v289
        %391 = vmatprep.subr.mxu0 0.0
        %392 = vmatpush1.msra.mxu0 %v288
        %393 = vmatprep.subr.mxu0 0.0
        %394 = vmatpush1.msra.mxu0 %v287
        %395 = vmatprep.subr.mxu0 0.0
        %396 = vmatpush1.msra.mxu0 %v286
        %397 = vmatprep.subr.mxu0 0.0
        %398 = vmatpush1.msra.mxu0 %v285
        %399 = vmatprep.subr.mxu0 0.0
        %400 = vmatpush1.msra.mxu0 %v284
        %401 = vmatprep.subr.mxu0 0.0
        %402 = vmatpush2.msra.mxu0 %v315
        %403 = vmatprep.subr.mxu0 0.0
        %404 = vmatpush2.msra.mxu0 %v314
        %405 = vmatprep.subr.mxu0 0.0
        %406 = vmatpush2.msra.mxu0 %v313
        %407 = vmatprep.subr.mxu0 0.0
        %408 = vmatpush2.msra.mxu0 %v312
        %409 = vmatprep.subr.mxu0 0.0
        %410 = vmatpush2.msra.mxu0 %v311
        %411 = vmatprep.subr.mxu0 0.0
        %412 = vmatpush2.msra.mxu0 %v310
        %413 = vmatprep.subr.mxu0 0.0
        %414 = vmatpush2.msra.mxu0 %v309
        %415 = vmatprep.subr.mxu0 0.0
        %416 = vmatpush2.msra.mxu0 %v308
        %417 = vmatprep.subr.mxu0 0.0
        %418 = vmatpush2.msra.mxu0 %v307
        %419 = vmatprep.subr.mxu0 0.0
        %420 = vmatpush2.msra.mxu0 %v306
        %421 = vmatprep.subr.mxu0 0.0
        %422 = vmatpush2.msra.mxu0 %v305
        %423 = vmatprep.subr.mxu0 0.0
        %424 = vmatpush2.msra.mxu0 %v304
        %425 = vmatprep.subr.mxu0 0.0
        %426 = vmatpush2.msra.mxu0 %v303
        %427 = vmatprep.subr.mxu0 0.0
        %428 = vmatpush2.msra.mxu0 %v302
        %429 = vmatprep.subr.mxu0 0.0
        %430 = vmatpush2.msra.mxu0 %v301
        %431 = vmatprep.subr.mxu0 0.0
        %432 = vmatpush2.msra.mxu0 %v300
        %433 = vmatprep.mubr.f32.mxu0 %v356
        %434 = vmatmul.mubr.f32.gmra.mxu0 %v352
        %v435 = vpop.f32.mrf.mxu0
        %v436 = vadd.f32 0.0, %v435
        %v437 = vpop.f32.mrf.mxu0
        %438 = vdwg.mxu0
        %439 = vmatprep.subr.mxu0 0.0
        %440 = vmatpush1.msra.mxu0 %v331
        %441 = vmatprep.subr.mxu0 0.0
        %442 = vmatpush1.msra.mxu0 %v330
        %443 = vmatprep.subr.mxu0 0.0
        %444 = vmatpush1.msra.mxu0 %v329
        %445 = vmatprep.subr.mxu0 0.0
        %446 = vmatpush1.msra.mxu0 %v328
        %447 = vmatprep.subr.mxu0 0.0
        %448 = vmatpush1.msra.mxu0 %v327
        %449 = vmatprep.subr.mxu0 0.0
        %450 = vmatpush1.msra.mxu0 %v326
        %451 = vmatprep.subr.mxu0 0.0
        %452 = vmatpush1.msra.mxu0 %v325
        %453 = vmatprep.subr.mxu0 0.0
        %454 = vmatpush1.msra.mxu0 %v324
        %455 = vmatprep.subr.mxu0 0.0
        %456 = vmatpush1.msra.mxu0 %v323
        %457 = vmatprep.subr.mxu0 0.0
        %458 = vmatpush1.msra.mxu0 %v322
        %459 = vmatprep.subr.mxu0 0.0
        %460 = vmatpush1.msra.mxu0 %v321
        %461 = vmatprep.subr.mxu0 0.0
        %462 = vmatpush1.msra.mxu0 %v320
        %463 = vmatprep.subr.mxu0 0.0
        %464 = vmatpush1.msra.mxu0 %v319
        %465 = vmatprep.subr.mxu0 0.0
        %466 = vmatpush1.msra.mxu0 %v318
        %467 = vmatprep.subr.mxu0 0.0
        %468 = vmatpush1.msra.mxu0 %v317
        %469 = vmatprep.subr.mxu0 0.0
        %470 = vmatpush1.msra.mxu0 %v316
        %471 = vmatprep.subr.mxu0 0.0
        %472 = vmatpush2.msra.mxu0 %v347
        %473 = vmatprep.subr.mxu0 0.0
        %474 = vmatpush2.msra.mxu0 %v346
        %475 = vmatprep.subr.mxu0 0.0
        %476 = vmatpush2.msra.mxu0 %v345
        %477 = vmatprep.subr.mxu0 0.0
        %478 = vmatpush2.msra.mxu0 %v344
        %479 = vmatprep.subr.mxu0 0.0
        %480 = vmatpush2.msra.mxu0 %v343
        %481 = vmatprep.subr.mxu0 0.0
        %482 = vmatpush2.msra.mxu0 %v342
        %483 = vmatprep.subr.mxu0 0.0
        %484 = vmatpush2.msra.mxu0 %v341
        %485 = vmatprep.subr.mxu0 0.0
        %486 = vmatpush2.msra.mxu0 %v340
        %487 = vmatprep.subr.mxu0 0.0
        %488 = vmatpush2.msra.mxu0 %v339
        %489 = vmatprep.subr.mxu0 0.0
        %490 = vmatpush2.msra.mxu0 %v338
        %491 = vmatprep.subr.mxu0 0.0
        %492 = vmatpush2.msra.mxu0 %v337
        %493 = vmatprep.subr.mxu0 0.0
        %494 = vmatpush2.msra.mxu0 %v336
        %495 = vmatprep.subr.mxu0 0.0
        %496 = vmatpush2.msra.mxu0 %v335
        %497 = vmatprep.subr.mxu0 0.0
        %498 = vmatpush2.msra.mxu0 %v334
        %499 = vmatprep.subr.mxu0 0.0
        %500 = vmatpush2.msra.mxu0 %v333
        %501 = vmatprep.subr.mxu0 0.0
        %502 = vmatpush2.msra.mxu0 %v332
        %503 = vmatprep.mubr.f32.mxu0 %v364
        %504 = vmatmul.mubr.f32.gmra.mxu0 %v360
        %v505 = vpop.f32.mrf.mxu0
        %v506 = vadd.f32 %v436, %v505
        %v507 = vpop.f32.mrf.mxu0
        %508 = vdwg.mxu0
        %s509 = scalar_lea.vmem [#allocation9], %s145
        %v510 = vld [vmem:[%s509] sm:$0x1]
        %v511 = vmul.f32 %v506, %v510
        %s512 = scalar_lea.vmem [#allocation2], %s145
        %vm513 = vcmask 253952
        %514 = vst.msk [vmem:[%s512] sm:$0x1] %vm513, %v511
      $region46: #{tpu_custom_call.1} parent=40 // loop_footer
        %s149 = sadd.s32 1, %s145
      $region47: #{tpu_custom_call.1} parent=40 // loop_footer_branch
        %144 = sbr.rel target = $region43
      $region48: #{tpu_custom_call.1} parent=40 // loop_exit
        _
    $region41: #{tpu_custom_call.1} parent=1 // pred_fallthru
      _
    %v515 = vld [vmem:[#allocation3] sm:$0xff]
    %v516 = vld [vmem:[#allocation3 + $0x8] sm:$0xff]
    %v517 = vld [vmem:[#allocation2] sm:$0xff]
    %v518 = vld [vmem:[#allocation2 + $0x8] sm:$0xff]
    %v519 = vld [vmem:[#allocation2 + $0x10] sm:$0xff]
    %v520 = vld [vmem:[#allocation2 + $0x18] sm:$0xff]
    %v521 = vld [vmem:[%s4] sm:$0x1]
    %v523 = vlaneseq
    %v524 = vshrl.u32 %v523, 7
    %v525 = vsub.s32 0, %v524
    %v526 = vrot.slane %v521, %v525
    %vm528 = vcmask 261120
    %v530 = vsel %vm528, %v515, 0
    %v533 = vsel %vm528, %v516, 0
    %535 = vmatprep.subr.mxu0 0.0
    %536 = vmatpush1.msra.mxu0 0.0
    %537 = vmatprep.subr.mxu0 0.0
    %538 = vmatpush1.msra.mxu0 0.0
    %539 = vmatprep.subr.mxu0 0.0
    %540 = vmatpush1.msra.mxu0 0.0
    %541 = vmatprep.subr.mxu0 0.0
    %542 = vmatpush1.msra.mxu0 0.0
    %543 = vmatprep.subr.mxu0 0.0
    %544 = vmatpush1.msra.mxu0 0.0
    %545 = vmatprep.subr.mxu0 0.0
    %546 = vmatpush1.msra.mxu0 0.0
    %547 = vmatprep.subr.mxu0 0.0
    %548 = vmatpush1.msra.mxu0 0.0
    %549 = vmatprep.subr.mxu0 0.0
    %550 = vmatpush1.msra.mxu0 0.0
    %551 = vmatprep.subr.mxu0 0.0
    %552 = vmatpush1.msra.mxu0 0.0
    %553 = vmatprep.subr.mxu0 0.0
    %554 = vmatpush1.msra.mxu0 0.0
    %555 = vmatprep.subr.mxu0 0.0
    %556 = vmatpush1.msra.mxu0 0.0
    %557 = vmatprep.subr.mxu0 0.0
    %558 = vmatpush1.msra.mxu0 0.0
    %559 = vmatprep.subr.mxu0 0.0
    %560 = vmatpush1.msra.mxu0 %v520
    %561 = vmatprep.subr.mxu0 0.0
    %562 = vmatpush1.msra.mxu0 %v519
    %563 = vmatprep.subr.mxu0 0.0
    %564 = vmatpush1.msra.mxu0 %v518
    %565 = vmatprep.subr.mxu0 0.0
    %566 = vmatpush1.msra.mxu0 %v517
    %567 = vmatprep.subr.mxu0 0.0
    %568 = vmatpush2.msra.mxu0 0.0
    %569 = vmatprep.subr.mxu0 0.0
    %570 = vmatpush2.msra.mxu0 0.0
    %571 = vmatprep.subr.mxu0 0.0
    %572 = vmatpush2.msra.mxu0 0.0
    %573 = vmatprep.subr.mxu0 0.0
    %574 = vmatpush2.msra.mxu0 0.0
    %575 = vmatprep.subr.mxu0 0.0
    %576 = vmatpush2.msra.mxu0 0.0
    %577 = vmatprep.subr.mxu0 0.0
    %578 = vmatpush2.msra.mxu0 0.0
    %579 = vmatprep.subr.mxu0 0.0
    %580 = vmatpush2.msra.mxu0 0.0
    %581 = vmatprep.subr.mxu0 0.0
    %582 = vmatpush2.msra.mxu0 0.0
    %583 = vmatprep.subr.mxu0 0.0
    %584 = vmatpush2.msra.mxu0 0.0
    %585 = vmatprep.subr.mxu0 0.0
    %586 = vmatpush2.msra.mxu0 0.0
    %587 = vmatprep.subr.mxu0 0.0
    %588 = vmatpush2.msra.mxu0 0.0
    %589 = vmatprep.subr.mxu0 0.0
    %590 = vmatpush2.msra.mxu0 0.0
    %591 = vmatprep.subr.mxu0 0.0
    %592 = vmatpush2.msra.mxu0 0.0
    %593 = vmatprep.subr.mxu0 0.0
    %594 = vmatpush2.msra.mxu0 0.0
    %595 = vmatprep.subr.mxu0 0.0
    %596 = vmatpush2.msra.mxu0 0.0
    %597 = vmatprep.subr.mxu0 0.0
    %598 = vmatpush2.msra.mxu0 0.0
    %599 = vmatprep.mubr.f32.mxu0 0.0
    %600 = vmatmul.mubr.f32.gmra.mxu0 %v530
    %v601 = vpop.f32.mrf.mxu0
    %v602 = vadd.f32 %v526, %v601
    %v603 = vpop.f32.mrf.mxu0
    %604 = vmatprep.mubr.f32.mxu0 0.0
    %605 = vmatmul.mubr.f32.gmra.mxu0 %v533
    %v606 = vpop.f32.mrf.mxu0
    %v607 = vadd.f32 %v526, %v606
    %v608 = vpop.f32.mrf.mxu0
    %609 = vdwg.mxu0
    %610 = vst.msk [vmem:[#allocation11] sm:$0xff] %vm528, %v602
    %611 = vst.msk [vmem:[#allocation11 + $0x8] sm:$0xff] %vm528, %v607
    // Predicated region
    $region49: #{tpu_custom_call.1} parent=1 // pred_check
      _
    $region50: #{tpu_custom_call.1} parent=1 // pred_check_branch
      %613 = sbr.rel (0) target = $region52
    $region51: #{tpu_custom_call.1} parent=1 // pred_region
      %s615 = ssub.s32 256, 256
      %616 = vsyncadd [#allocation5], %s615
      %s617 = sshll.u32 [#allocation11], 4
      %s618 = int_to_ptr.vmem [resolvable:$true] %s617
      %623 = dma.vmem_to_hbm [thread:$0]  %s618, 256, %s5, [#allocation5], 128, 128, 8
    $region52: #{tpu_custom_call.1} parent=1 // pred_fallthru
      _
    // Predicated region
    $region53: #{tpu_custom_call.1} parent=1 // pred_check
      _
    $region54: #{tpu_custom_call.1} parent=1 // pred_check_branch
      %625 = sbr.rel (0) target = $region56
    $region55: #{tpu_custom_call.1} parent=1 // pred_region
      %626 = dma.done [#allocation5], 256
    $region56: #{tpu_custom_call.1} parent=1 // pred_fallthru
      _
    %627 = vsyncpa [#allocation4], 1
    %628 = vsyncpa [#allocation7], 1
    %629 = vsyncpa [#allocation10], 1
    %630 = vsyncpa [#allocation5], 1

</llo_original>
